<compile_context>
chip_gen: v7x
topology: tpu7x:2x2x1
jax: 0.10.0
libtpu: 0.0.40
codegen_flags: <defaults>
</compile_context>

<pallas_src>
import functools
import math

import jax
import jax.numpy as jnp
from jax import lax
from jax.experimental import pallas as pl
from jax.experimental.pallas import tpu as pltpu


def _attn_logits_kernel(q_ref, k_ref, out_ref, *, inv_scale, clip):
    # q_ref: (TQ, D), k_ref: (TK, D), out_ref: (TQ, TK)
    q = q_ref[...] * inv_scale  # scale the small (TQ, D) tile, not the logits
    logits = lax.dot_general(
        q,
        k_ref[...],
        dimension_numbers=(((1,), (1,)), ((), ())),  # NT: contract last dims
        preferred_element_type=jnp.float32,
    )
    if clip is not None:
        logits = clip * jnp.tanh(logits)
    out_ref[...] = logits.astype(out_ref.dtype)


def _attn_logits_kernel_mask(q_ref, k_ref, mask_ref, out_ref, *, inv_scale, clip):
    # mask_ref: (TQ or 1, TK or 1), compact dtype; broadcast happens here.
    q = q_ref[...] * inv_scale
    logits = lax.dot_general(
        q,
        k_ref[...],
        dimension_numbers=(((1,), (1,)), ((), ())),
        preferred_element_type=jnp.float32,
    )
    if clip is not None:
        logits = clip * jnp.tanh(logits)
    logits = logits + mask_ref[...].astype(jnp.float32) * -1000000000.0
    out_ref[...] = logits.astype(out_ref.dtype)


def _choose_tile(dim, target, multiple):
    """Tile size: full extent for small dims, else the largest aligned tile
    <= target.  Non-divisible extents are handled by a cdiv grid with
    masked edge blocks (no full-extent blowup)."""
    if dim <= target:
        return dim  # full array extent is always a legal block shape
    return max(multiple, (int(target) // multiple) * multiple)


def scaled_dot_product_attention_logits(q, k, mask=None, clip=None, temp=1.0,
                                        *, tq=512, tk=1024, out_dtype=None):
    """Pallas equivalent of ScaledDotProductAttentionLogits.forward.

    q: [..., Sq, D], k: [..., Sk, D], mask optional and broadcastable to
    [..., Sq, Sk] (bool/int8/bf16/f32 all accepted, kept compact in HBM).
    Returns [..., Sq, Sk] in `out_dtype` (default: promoted q/k dtype, i.e.
    torch.matmul semantics).
    """
    batch_dims = tuple(q.shape[:-2])
    Sq, D = q.shape[-2:]
    Sk, Dk = k.shape[-2:]
    assert D == Dk, "q and k must share the feature dimension"
    assert tuple(k.shape[:-2]) == batch_dims, "q and k must share batch dims"

    B = math.prod(batch_dims) if batch_dims else 1
    q3 = q.reshape(B, Sq, D)
    k3 = k.reshape(B, Sk, D)

    if out_dtype is None:
        out_dtype = jnp.promote_types(q.dtype, k.dtype)
    out_dtype = jnp.dtype(out_dtype)

    inv_scale = float(1.0 / (float(D) ** 0.5) / float(temp))
    clip_val = None if clip is None else float(clip)

    # Tile sizes: TQ sublane-aligned (x8), TK lane-dense (x128) when tiled.
    TQ = _choose_tile(Sq, int(tq), 8)
    TK = _choose_tile(Sk, int(tk), 128)
    grid = (B, pl.cdiv(Sq, TQ), pl.cdiv(Sk, TK))

    out_shape = jax.ShapeDtypeStruct((B, Sq, Sk), out_dtype)

    q_spec = pl.BlockSpec((None, TQ, D), lambda b, iq, ik: (b, iq, 0))
    k_spec = pl.BlockSpec((None, TK, D), lambda b, iq, ik: (b, ik, 0))
    o_spec = pl.BlockSpec((None, TQ, TK), lambda b, iq, ik: (b, iq, ik))

    # --- Mask: keep compact dtype, express broadcast via index_map. ---
    in_specs = [q_spec, k_spec]
    operands = [q3, k3]
    mask_tile_bytes = 0
    if mask is not None:
        m = jnp.asarray(mask)
        target_rank = len(batch_dims) + 2
        assert m.ndim <= target_rank, "mask rank exceeds q's rank"
        m = m.reshape((1,) * (target_rank - m.ndim) + m.shape)
        m_batch = tuple(m.shape[:-2])
        mSq, mSk = m.shape[-2:]
        assert mSq in (1, Sq) and mSk in (1, Sk), "mask not broadcastable"
        assert all(mb in (1, qb) for mb, qb in zip(m_batch, batch_dims)), \
            "mask not broadcastable to q's batch dims"

        if m_batch == batch_dims:
            Bm = B
        elif all(mb == 1 for mb in m_batch):
            Bm = 1
        else:
            # Partial batch broadcast: materialize batch dims only, keep the
            # compact dtype and the (possibly size-1) Sq/Sk dims.
            m = jnp.broadcast_to(m, batch_dims + (mSq, mSk))
            Bm = B
        m3 = m.reshape(Bm, mSq, mSk)

        bTQ = TQ if mSq == Sq else 1
        bTK = TK if mSk == Sk else 1
        batch_full = (Bm == B)
        sq_full = (mSq == Sq)
        sk_full = (mSk == Sk)

        def m_index(b, iq, ik):
            return (b if batch_full else 0,
                    iq if sq_full else 0,
                    ik if sk_full else 0)

        m_spec = pl.BlockSpec((None, bTQ, bTK), m_index)
        in_specs.append(m_spec)
        operands.append(m3)
        mask_tile_bytes = bTQ * bTK * m3.dtype.itemsize
        kernel = functools.partial(
            _attn_logits_kernel_mask, inv_scale=inv_scale, clip=clip_val)
    else:
        kernel = functools.partial(
            _attn_logits_kernel, inv_scale=inv_scale, clip=clip_val)

    # VMEM budget: double-buffered (q + k + out + mask) tiles, floor 32 MiB
    # (raises v5e's 16 MiB default), ceiling below v7x's 64 MiB physical.
    per_step = (TQ * D * q3.dtype.itemsize
                + TK * D * k3.dtype.itemsize
                + TQ * TK * out_dtype.itemsize
                + mask_tile_bytes)
    vmem_limit = int(min(56 * 2**20, max(32 * 2**20, 2 * per_step + (8 << 20))))

    compiler_params = pltpu.CompilerParams(
        dimension_semantics=("parallel", "parallel", "parallel"),
        vmem_limit_bytes=vmem_limit,
    )

    out = pl.pallas_call(
        kernel,
        out_shape=out_shape,
        grid_spec=pltpu.PrefetchScalarGridSpec(
            num_scalar_prefetch=0,
            grid=grid,
            in_specs=in_specs,
            out_specs=o_spec,
        ),
        compiler_params=compiler_params,
    )(*operands)

    return out.reshape(batch_dims + (Sq, Sk))


def _reference(q, k, mask=None, clip=None, temp=1.0):
    logits = jnp.einsum("...qd,...kd->...qk",
                        q.astype(jnp.float32), k.astype(jnp.float32))
    logits = logits / (float(k.shape[-1]) ** 0.5)
    logits = logits / temp
    if clip is not None:
        logits = clip * jnp.tanh(logits)
    if mask is not None:
        logits = logits + mask.astype(jnp.float32) * -1000000000.0
    return logits


if __name__ == "__main__":
    key = jax.random.PRNGKey(0)
    kq, kk, km, kq2, kk2, km2, kq3, kk3, km3 = jax.random.split(key, 9)

    # --- Case A: small module-like shapes, broadcast int8 mask (1,1,Sq,Sk),
    #     exercises the index_map-broadcast mask path. grid=(B*H,1,1).
    B, H, Sq, Sk, D = 2, 4, 8, 8, 32
    q = jax.random.normal(kq, (B, H, Sq, D), dtype=jnp.float32)
    k = jax.random.normal(kk, (B, H, Sk, D), dtype=jnp.float32)
    mask = (jax.random.uniform(km, (1, 1, Sq, Sk)) > 0.7).astype(jnp.int8)

    out1 = scaled_dot_product_attention_logits(q, k)
    out2 = scaled_dot_product_attention_logits(q, k, mask=mask, clip=10.0, temp=0.5)
    jax.block_until_ready(out1)
    jax.block_until_ready(out2)
    ref1 = _reference(q, k)
    ref2 = _reference(q, k, mask=mask, clip=10.0, temp=0.5)
    assert jnp.allclose(out1, ref1, atol=2e-3, rtol=2e-3)
    assert jnp.allclose(out2, ref2, atol=2e-3, rtol=2e-3)

    # --- Case B: tiled path with NON-divisible Sq/Sk (cdiv grid, masked edge
    #     blocks), bool mask matching batch dims. grid=(1,2,3).
    B2, Sq2, Sk2, D2 = 1, 200, 320, 64
    q2 = jax.random.normal(kq2, (B2, Sq2, D2), dtype=jnp.float32)
    k2 = jax.random.normal(kk2, (B2, Sk2, D2), dtype=jnp.float32)
    mask2 = jax.random.uniform(km2, (B2, Sq2, Sk2)) > 0.5

    out3 = scaled_dot_product_attention_logits(q2, k2, tq=128, tk=128)
    out4 = scaled_dot_product_attention_logits(
        q2, k2, mask=mask2, clip=5.0, temp=2.0, tq=128, tk=128)
    jax.block_until_ready(out3)
    jax.block_until_ready(out4)
    ref3 = _reference(q2, k2)
    ref4 = _reference(q2, k2, mask=mask2, clip=5.0, temp=2.0)
    assert jnp.allclose(out3, ref3, atol=2e-3, rtol=2e-3)
    assert jnp.allclose(out4, ref4, atol=2e-3, rtol=2e-3)

    # --- Case C: bf16 inputs -> bf16 logits (half the HBM writeback) with a
    #     compact int8 mask; compared against an f32 reference with bf16-level
    #     tolerance (rtol covers the -1e9 masked entries).
    B3, Sq3, Sk3, D3 = 1, 128, 256, 32
    q3 = jax.random.normal(kq3, (B3, Sq3, D3), dtype=jnp.bfloat16)
    k3 = jax.random.normal(kk3, (B3, Sk3, D3), dtype=jnp.bfloat16)
    mask3 = (jax.random.uniform(km3, (1, Sq3, Sk3)) > 0.8).astype(jnp.int8)

    out5 = scaled_dot_product_attention_logits(q3, k3, mask=mask3)
    jax.block_until_ready(out5)
    assert out5.dtype == jnp.bfloat16
    ref5 = _reference(q3, k3, mask=mask3)
    assert jnp.allclose(out5.astype(jnp.float32), ref5, atol=0.1, rtol=0.05)

    print("KERNEL_OK")
</pallas_src>

<mosaic_0001>
module attributes {stable_mosaic.version = 11 : i64} {
  func.func @_attn_logits_kernel(%arg0: i32, %arg1: i32, %arg2: i32, %arg3: memref<1x8x32xf32, #tpu.memory_space<vmem>>, %arg4: memref<1x8x32xf32, #tpu.memory_space<vmem>>, %arg5: memref<1x8x8xf32, #tpu.memory_space<vmem>>) attributes {dimension_semantics = [#tpu.dimension_semantics<parallel>, #tpu.dimension_semantics<parallel>, #tpu.dimension_semantics<parallel>], iteration_bounds = array<i64: 8, 1, 1>, scalar_prefetch = 0 : i64, scratch_operands = 0 : i64, tpu.core_type = #tpu.core_type<tc>, window_params = [{transform_indices = @transform_0, window_bounds = array<i64: 1, 8, 32>}, {transform_indices = @transform_1, window_bounds = array<i64: 1, 8, 32>}, {transform_indices = @transform_2, window_bounds = array<i64: 1, 8, 8>}]} {
    %c0 = arith.constant 0 : index
    %c0_0 = arith.constant 0 : index
    %c0_1 = arith.constant 0 : index
    %0 = vector.load %arg3[%c0, %c0_0, %c0_1] : memref<1x8x32xf32, #tpu.memory_space<vmem>>, vector<1x8x32xf32>
    %1 = vector.shape_cast %0 : vector<1x8x32xf32> to vector<8x32xf32>
    %cst = arith.constant 0.176776692 : f32
    %2 = vector.broadcast %cst : f32 to vector<8x32xf32>
    %3 = arith.mulf %1, %2 : vector<8x32xf32>
    %c0_2 = arith.constant 0 : index
    %c0_3 = arith.constant 0 : index
    %c0_4 = arith.constant 0 : index
    %4 = vector.load %arg4[%c0_2, %c0_3, %c0_4] : memref<1x8x32xf32, #tpu.memory_space<vmem>>, vector<1x8x32xf32>
    %5 = vector.shape_cast %4 : vector<1x8x32xf32> to vector<8x32xf32>
    %cst_5 = arith.constant dense<0.000000e+00> : vector<8x8xf32>
    %6 = tpu.matmul %3, %5, %cst_5 {dimension_numbers = #tpu.dot_dimension_numbers<[1], [1], [0], [0], [0, 0, 1, 0], [], []>} : vector<8x32xf32>, vector<8x32xf32>, vector<8x8xf32> -> vector<8x8xf32>
    %c0_6 = arith.constant 0 : index
    %c0_7 = arith.constant 0 : index
    %c0_8 = arith.constant 0 : index
    %7 = vector.load %arg5[%c0_6, %c0_7, %c0_8] : memref<1x8x8xf32, #tpu.memory_space<vmem>>, vector<1x8x8xf32>
    %8 = vector.shape_cast %7 : vector<1x8x8xf32> to vector<8x8xf32>
    %9 = vector.shape_cast %6 : vector<8x8xf32> to vector<1x8x8xf32>
    tpu.vector_store %arg5[%c0_6, %c0_7, %c0_8], %9 {strides = array<i32>} : memref<1x8x8xf32, #tpu.memory_space<vmem>>, vector<1x8x8xf32>,
    return
  }
  func.func @transform_0(%arg0: i32, %arg1: i32, %arg2: i32) -> (i32, i32, i32) {
    %c0_i32 = arith.constant 0 : i32
    %c0_i32_0 = arith.constant 0 : i32
    return %arg0, %arg1, %c0_i32 : i32, i32, i32
  }
  func.func @transform_1(%arg0: i32, %arg1: i32, %arg2: i32) -> (i32, i32, i32) {
    %c0_i32 = arith.constant 0 : i32
    %c0_i32_0 = arith.constant 0 : i32
    return %arg0, %arg2, %c0_i32 : i32, i32, i32
  }
  func.func @transform_2(%arg0: i32, %arg1: i32, %arg2: i32) -> (i32, i32, i32) {
    %c0_i32 = arith.constant 0 : i32
    return %arg0, %arg1, %arg2 : i32, i32, i32
  }
}

</mosaic_0001>

<llo_original>
// kernel: tpu_custom_call.1
$region0: #{tpu_custom_call.1}
  #allocation0 [shape = 'u32[]', space=smem, size = 0x4, offset = 0x4, fixed_abs, tag = 'smem constant byte address 0x4 - core index']
  #allocation1 [shape = 'u32[144,128]{1,0:T(1,128)}', space=vmem, size = 0x12000, scoped, tag = 'internal scratch']
  %s0 = inlined_call_operand.hbm [shape: f32[8,8,32], index: 0, kind: input, shape index: {}]
  %s1 = inlined_call_operand.hbm [shape: f32[8,8,32], index: 1, kind: input, shape index: {}]
  %s2 = inlined_call_operand.hbm [shape: f32[8,8,8], index: 2, kind: output, shape index: {}]
  %s3 = sld [smem:[#allocation0]]
  $region49: #{tpu_custom_call.1} parent=0
    _
  %s5 = ssub.s32 1, %s3
  %s6 = scalar_select 0, %s5, %s3
  $region1: #{tpu_custom_call.1} parent=0
    #allocation2 [shape = 'u8[8192]{0}', space=vmem, size = 0x2000, scoped, tag = 'input window, operand 0']
    #allocation3 [shape = 's32[2]{0}', space=sflag, size = 0x8, scoped, tag = 'scoped memory for tpu_custom_call.1']
    #allocation4 [shape = 's32[2]{0}', space=sflag, size = 0x8, scoped, tag = 'scoped memory for tpu_custom_call.1']
    #allocation5 [shape = 'u8[8192]{0}', space=vmem, size = 0x2000, scoped, tag = 'input window, operand 1']
    #allocation6 [shape = 's32[2]{0}', space=sflag, size = 0x8, scoped, tag = 'scoped memory for tpu_custom_call.1']
    #allocation7 [shape = 'u8[8192]{0}', space=vmem, size = 0x2000, scoped, tag = 'output window, operand 0']
    %7 = vsyncpa [#allocation3], 0
    %s8 = scalar_lea.sflag [#allocation3], 1
    %9 = vsyncpa %s8, 0
    %10 = vsyncpa [#allocation6], 0
    %s11 = scalar_lea.sflag [#allocation6], 1
    %12 = vsyncpa %s11, 0
    %13 = vsyncpa [#allocation4], 0
    %s14 = scalar_lea.sflag [#allocation4], 1
    %15 = vsyncpa %s14, 0
    loop: start=0, step=1, limit=10
    $region2: #{tpu_custom_call.1} parent=1 // loop_pre_header
      _
    $region3: #{tpu_custom_call.1} parent=1 // loop_header
      %s17 = sphi 0, %s21
      %p18 = scmp.ge.s32.totalorder %s17, 10
      %s24 = sphi 0, %s43
      %s25 = sphi 0, %s39
      %s26 = sphi 0, %s35
      %s27 = sphi 0, %s24
      %s28 = sphi 0, %s25
      %s29 = sphi 0, %s26
      %s30 = sphi 0, %s27
      %s31 = sphi 0, %s28
      %s32 = sphi 0, %s29
      %s48 = sphi 0, %s50
      %s51 = sphi 0, %s48
      %s52 = sphi 0, %s51
      %s68 = sphi 0, %s52
      %s76 = sphi 0, %s78
      %s79 = sphi 0, %s76
      %s80 = sphi 0, %s79
      %s96 = sphi 0, %s80
      %s106 = sphi 0, %s108
      %s109 = sphi 0, %s106
      %s110 = sphi 0, %s109
      %s126 = sphi 0, %s110
    $region4: #{tpu_custom_call.1} parent=1 // loop_header_branch
      %20 = sbr.rel (%p18) target = $region8
    $region5: #{tpu_custom_call.1} parent=1 // loop_body
      %s22 = ssub.s32 %s17, 1
      %s23 = ssub.s32 %s17, 2
      %s33 = sadd.s32 1, %s26
      %p34 = scmp.ge.s32.totalorder %s33, 1
      %s35 = scalar_select %p34, 0, %s33
      %s36 = sadd.s32 1, %s25
      %s37 = scalar_select %p34, %s36, %s25
      %p38 = scmp.ge.s32.totalorder %s37, 1
      %s39 = scalar_select %p38, 0, %s37
      %s40 = sadd.s32 1, %s24
      %s41 = scalar_select %p38, %s40, %s24
      %p42 = scmp.ge.s32.totalorder %s41, 8
      %s43 = scalar_select %p42, 0, %s41
      %s44 = ssub.s32 %s24, %s43
      %s45 = ssub.s32 %s25, %s39
      %s46 = sor.u32 %s44, %s45
      %p47 = scmp.eq.s32.totalorder %s46, 0
      %s49 = sadd.s32 %s48, 1
      %s50 = scalar_select %p47, %s48, %s49
      %p53 = pneg %p47
      %p54 = scmp.eq.s32.totalorder %s17, 7
      %p55 = por %p53, %p54
      %p56 = scmp.ne.s32.totalorder %s48, %s51
      %p57 = scmp.eq.s32.totalorder %s17, 0
      %p58 = por %p56, %p57
      %p59 = scmp.ne.s32.totalorder %s48, %s51
      %p60 = scmp.eq.s32.totalorder %s22, 7
      %p61 = por %p59, %p60
      %p62 = scmp.ne.s32.totalorder %s51, %s52
      %p63 = scmp.eq.s32.totalorder %s22, 0
      %p64 = por %p62, %p63
      %p65 = scmp.ne.s32.totalorder %s51, %s52
      %p66 = scmp.eq.s32.totalorder %s23, 7
      %p67 = por %p65, %p66
      %p69 = scmp.ne.s32.totalorder %s52, %s68
      %p70 = scmp.eq.s32.totalorder %s23, 0
      %p71 = por %p69, %p70
      %s72 = ssub.s32 %s24, %s43
      %s73 = ssub.s32 %s26, %s35
      %s74 = sor.u32 %s72, %s73
      %p75 = scmp.eq.s32.totalorder %s74, 0
      %s77 = sadd.s32 %s76, 1
      %s78 = scalar_select %p75, %s76, %s77
      %p81 = pneg %p75
      %p82 = scmp.eq.s32.totalorder %s17, 7
      %p83 = por %p81, %p82
      %p84 = scmp.ne.s32.totalorder %s76, %s79
      %p85 = scmp.eq.s32.totalorder %s17, 0
      %p86 = por %p84, %p85
      %p87 = scmp.ne.s32.totalorder %s76, %s79
      %p88 = scmp.eq.s32.totalorder %s22, 7
      %p89 = por %p87, %p88
      %p90 = scmp.ne.s32.totalorder %s79, %s80
      %p91 = scmp.eq.s32.totalorder %s22, 0
      %p92 = por %p90, %p91
      %p93 = scmp.ne.s32.totalorder %s79, %s80
      %p94 = scmp.eq.s32.totalorder %s23, 7
      %p95 = por %p93, %p94
      %p97 = scmp.ne.s32.totalorder %s80, %s96
      %p98 = scmp.eq.s32.totalorder %s23, 0
      %p99 = por %p97, %p98
      %s100 = ssub.s32 %s24, %s43
      %s101 = ssub.s32 %s25, %s39
      %s102 = sor.u32 %s100, %s101
      %s103 = ssub.s32 %s26, %s35
      %s104 = sor.u32 %s102, %s103
      %p105 = scmp.eq.s32.totalorder %s104, 0
      %s107 = sadd.s32 %s106, 1
      %s108 = scalar_select %p105, %s106, %s107
      %p111 = pneg %p105
      %p112 = scmp.eq.s32.totalorder %s17, 7
      %p113 = por %p111, %p112
      %p114 = scmp.ne.s32.totalorder %s106, %s109
      %p115 = scmp.eq.s32.totalorder %s17, 0
      %p116 = por %p114, %p115
      %p117 = scmp.ne.s32.totalorder %s106, %s109
      %p118 = scmp.eq.s32.totalorder %s22, 7
      %p119 = por %p117, %p118
      %p120 = scmp.ne.s32.totalorder %s109, %s110
      %p121 = scmp.eq.s32.totalorder %s22, 0
      %p122 = por %p120, %p121
      %p123 = scmp.ne.s32.totalorder %s109, %s110
      %p124 = scmp.eq.s32.totalorder %s23, 7
      %p125 = por %p123, %p124
      %p127 = scmp.ne.s32.totalorder %s110, %s126
      %p128 = scmp.eq.s32.totalorder %s23, 0
      %p129 = por %p127, %p128
      %p130 = scmp.le.s32.totalorder 1, %s17
      %p131 = scmp.lt.s32.totalorder %s17, 9
      %p132 = pnand %p130, %p131
      %p133 = pneg %p132
      // Predicated region
      $region9: #{tpu_custom_call.1} parent=5 // pred_check
        _
      $region10: #{tpu_custom_call.1} parent=5 // pred_check_branch
        %135 = sbr.rel (%p132) target = $region12
      $region11: #{tpu_custom_call.1} parent=5 // pred_region
        %s136 = ssub.s32 %s17, 1
      $region12: #{tpu_custom_call.1} parent=5 // pred_fallthru
        _
      %p137 = scmp.lt.s32.totalorder %s17, 8
      // Predicated region
      $region13: #{tpu_custom_call.1} parent=5 // pred_check
        %p138 = pneg %p137
      $region14: #{tpu_custom_call.1} parent=5 // pred_check_branch
        %140 = sbr.rel (%p138) target = $region16
      $region15: #{tpu_custom_call.1} parent=5 // pred_region
        // Predicated region
        $region17: #{tpu_custom_call.1} parent=15 // pred_check
          %p141 = pneg %p58
        $region18: #{tpu_custom_call.1} parent=15 // pred_check_branch
          %143 = sbr.rel (%p141) target = $region20
        $region19: #{tpu_custom_call.1} parent=15 // pred_region
          %s144 = sand.u32 %s48, 1
          %s145 = scalar_lea.sflag [#allocation3], %s144
          %s146 = sand.u32 %s48, 1
          %s147 = smul.addr %s146, 8
          %s148 = scalar_lea.vmem [#allocation2], %s147
          %s150 = ssub.s32 128, 128
          %151 = vsyncadd %s145, %s150
          %s152 = sadd.s32 %s25, %s24
          %s153 = smul.addr %s152, 128
          %s154 = scalar_lea.hbm %s0, %s153
          %s156 = sshll.u32 %s148, 4
          %s157 = int_to_ptr.vmem [resolvable:$true] %s156
          %159 = dma.hbm_to_vmem [thread:$0]  %s154, 128, %s157, %s145
        $region20: #{tpu_custom_call.1} parent=15 // pred_fallthru
          _
        // Predicated region
        $region21: #{tpu_custom_call.1} parent=15 // pred_check
          %p160 = pneg %p86
        $region22: #{tpu_custom_call.1} parent=15 // pred_check_branch
          %162 = sbr.rel (%p160) target = $region24
        $region23: #{tpu_custom_call.1} parent=15 // pred_region
          %s163 = sand.u32 %s76, 1
          %s164 = scalar_lea.sflag [#allocation6], %s163
          %s165 = sand.u32 %s76, 1
          %s166 = smul.addr %s165, 8
          %s167 = scalar_lea.vmem [#allocation5], %s166
          %s169 = ssub.s32 128, 128
          %170 = vsyncadd %s164, %s169
          %s171 = sadd.s32 %s26, %s24
          %s172 = smul.addr %s171, 128
          %s173 = scalar_lea.hbm %s1, %s172
          %s175 = sshll.u32 %s167, 4
          %s176 = int_to_ptr.vmem [resolvable:$true] %s175
          %178 = dma.hbm_to_vmem [thread:$0]  %s173, 128, %s176, %s164
        $region24: #{tpu_custom_call.1} parent=15 // pred_fallthru
          _
      $region16: #{tpu_custom_call.1} parent=5 // pred_fallthru
        _
      %p179 = scmp.le.s32.totalorder 1, %s17
      %p180 = scmp.lt.s32.totalorder %s17, 9
      %p181 = pnand %p179, %p180
      %p182 = pneg %p181
      // Predicated region
      $region25: #{tpu_custom_call.1} parent=5 // pred_check
        _
      $region26: #{tpu_custom_call.1} parent=5 // pred_check_branch
        %184 = sbr.rel (%p181) target = $region28
      $region27: #{tpu_custom_call.1} parent=5 // pred_region
        %s185 = ssub.s32 %s17, 1
        %s186 = sand.u32 %s51, 1
        %s187 = scalar_lea.sflag [#allocation3], %s186
        %s188 = sand.u32 %s51, 1
        %s189 = smul.addr %s188, 8
        %s190 = scalar_lea.vmem [#allocation2], %s189
        // Predicated region
        $region29: #{tpu_custom_call.1} parent=27 // pred_check
          %p191 = pneg %p64
        $region30: #{tpu_custom_call.1} parent=27 // pred_check_branch
          %193 = sbr.rel (%p191) target = $region32
        $region31: #{tpu_custom_call.1} parent=27 // pred_region
          %194 = dma.done %s187, 128
        $region32: #{tpu_custom_call.1} parent=27 // pred_fallthru
          _
        %s195 = sand.u32 %s79, 1
        %s196 = scalar_lea.sflag [#allocation6], %s195
        %s197 = sand.u32 %s79, 1
        %s198 = smul.addr %s197, 8
        %s199 = scalar_lea.vmem [#allocation5], %s198
        // Predicated region
        $region33: #{tpu_custom_call.1} parent=27 // pred_check
          %p200 = pneg %p92
        $region34: #{tpu_custom_call.1} parent=27 // pred_check_branch
          %202 = sbr.rel (%p200) target = $region36
        $region35: #{tpu_custom_call.1} parent=27 // pred_region
          %203 = dma.done %s196, 128
        $region36: #{tpu_custom_call.1} parent=27 // pred_fallthru
          _
        %s204 = sand.u32 %s51, 1
        %s205 = scalar_lea.sflag [#allocation3], %s204
        %s206 = sand.u32 %s51, 1
        %s207 = smul.addr %s206, 8
        %s208 = scalar_lea.vmem [#allocation2], %s207
        %p209 = pneg %p64
        %p210 = pneg %p61
        %s211 = sand.u32 %s79, 1
        %s212 = scalar_lea.sflag [#allocation6], %s211
        %s213 = sand.u32 %s79, 1
        %s214 = smul.addr %s213, 8
        %s215 = scalar_lea.vmem [#allocation5], %s214
        %p216 = pneg %p92
        %p217 = pneg %p89
        %p218 = pneg %p122
        %p219 = pneg %p119
        %s220 = sand.u32 %s109, 1
        %s221 = scalar_lea.sflag [#allocation4], %s220
        %s222 = sand.u32 %s109, 1
        %s223 = smul.addr %s222, 8
        %s224 = scalar_lea.vmem [#allocation7], %s223
        %v225 = vld [vmem:[%s190] sm:$0xff]
        %v226 = vmul.f32 %v225, 0.17677669
        %v227 = vld [vmem:[%s199] sm:$0xff]
        %vm228 = vcmask 261120
        %v230 = vsel %vm228, %v226, 0
        %v233 = vsel %vm228, %v227, 0
        %235 = vmatprep.subr.mxu0 0.0
        %236 = vmatpush1.xpose.msra.mxu0 %v233
        %237 = vmatprep.subr.mxu0 0.0
        %238 = vmatpush1.xpose.msra.mxu0 0.0
        %239 = vmatprep.subr.mxu0 0.0
        %240 = vmatpush1.xpose.msra.mxu0 0.0
        %241 = vmatprep.subr.mxu0 0.0
        %242 = vmatpush1.xpose.msra.mxu0 0.0
        %243 = vmatprep.subr.mxu0 0.0
        %244 = vmatpush1.xpose.msra.mxu0 0.0
        %245 = vmatprep.subr.mxu0 0.0
        %246 = vmatpush1.xpose.msra.mxu0 0.0
        %247 = vmatprep.subr.mxu0 0.0
        %248 = vmatpush1.xpose.msra.mxu0 0.0
        %249 = vmatprep.subr.mxu0 0.0
        %250 = vmatpush1.xpose.msra.mxu0 0.0
        %251 = vmatprep.subr.mxu0 0.0
        %252 = vmatpush1.xpose.msra.mxu0 0.0
        %253 = vmatprep.subr.mxu0 0.0
        %254 = vmatpush1.xpose.msra.mxu0 0.0
        %255 = vmatprep.subr.mxu0 0.0
        %256 = vmatpush1.xpose.msra.mxu0 0.0
        %257 = vmatprep.subr.mxu0 0.0
        %258 = vmatpush1.xpose.msra.mxu0 0.0
        %259 = vmatprep.subr.mxu0 0.0
        %260 = vmatpush1.xpose.msra.mxu0 0.0
        %261 = vmatprep.subr.mxu0 0.0
        %262 = vmatpush1.xpose.msra.mxu0 0.0
        %263 = vmatprep.subr.mxu0 0.0
        %264 = vmatpush1.xpose.msra.mxu0 0.0
        %265 = vmatprep.subr.mxu0 0.0
        %266 = vmatpush1.xpose.msra.mxu0 0.0
        %267 = vmatprep.subr.mxu0 0.0
        %268 = vmatpush1.xpose.msra.mxu0 0.0
        %269 = vmatprep.subr.mxu0 0.0
        %270 = vmatpush1.xpose.msra.mxu0 0.0
        %271 = vmatprep.subr.mxu0 0.0
        %272 = vmatpush1.xpose.msra.mxu0 0.0
        %273 = vmatprep.subr.mxu0 0.0
        %274 = vmatpush1.xpose.msra.mxu0 0.0
        %275 = vmatprep.subr.mxu0 0.0
        %276 = vmatpush1.xpose.msra.mxu0 0.0
        %277 = vmatprep.subr.mxu0 0.0
        %278 = vmatpush1.xpose.msra.mxu0 0.0
        %279 = vmatprep.subr.mxu0 0.0
        %280 = vmatpush1.xpose.msra.mxu0 0.0
        %281 = vmatprep.subr.mxu0 0.0
        %282 = vmatpush1.xpose.msra.mxu0 0.0
        %283 = vmatprep.subr.mxu0 0.0
        %284 = vmatpush1.xpose.msra.mxu0 0.0
        %285 = vmatprep.subr.mxu0 0.0
        %286 = vmatpush1.xpose.msra.mxu0 0.0
        %287 = vmatprep.subr.mxu0 0.0
        %288 = vmatpush1.xpose.msra.mxu0 0.0
        %289 = vmatprep.subr.mxu0 0.0
        %290 = vmatpush1.xpose.msra.mxu0 0.0
        %291 = vmatprep.subr.mxu0 0.0
        %292 = vmatpush1.xpose.msra.mxu0 0.0
        %293 = vmatprep.subr.mxu0 0.0
        %294 = vmatpush1.xpose.msra.mxu0 0.0
        %295 = vmatprep.subr.mxu0 0.0
        %296 = vmatpush1.xpose.msra.mxu0 0.0
        %297 = vmatprep.subr.mxu0 0.0
        %298 = vmatpush1.xpose.msra.mxu0 0.0
        %299 = vmatprep.mubr.f32.mxu0 0.0
        %300 = vmatmul.mubr.f32.gmra.mrb[0].mxu0 %v230
        %v301 = vpop.f32.mrb[0].mxu0
        %v302 = vadd.f32 0.0, %v301
        %v303 = vpop.f32.mrb[0].mxu0
        %304 = vdwg.mxu0
        %vm305 = vcmask 64512
        %306 = vst.msk [vmem:[%s224] sm:$0xff] %vm305, %v302
        %s307 = sand.u32 %s109, 1
        %s308 = scalar_lea.sflag [#allocation4], %s307
        %s309 = sand.u32 %s109, 1
        %s310 = smul.addr %s309, 8
        %s311 = scalar_lea.vmem [#allocation7], %s310
        // Predicated region
        $region37: #{tpu_custom_call.1} parent=27 // pred_check
          %p312 = pneg %p119
        $region38: #{tpu_custom_call.1} parent=27 // pred_check_branch
          %314 = sbr.rel (%p312) target = $region40
        $region39: #{tpu_custom_call.1} parent=27 // pred_region
          %s316 = ssub.s32 128, 128
          %317 = vsyncadd %s308, %s316
          %s318 = sadd.s32 %s29, %s28
          %s319 = sadd.s32 %s318, %s27
          %s320 = smul.addr %s319, 128
          %s321 = scalar_lea.hbm %s2, %s320
          %s323 = sshll.u32 %s311, 4
          %s324 = int_to_ptr.vmem [resolvable:$true] %s323
          %326 = dma.vmem_to_hbm [thread:$0]  %s324, 128, %s321, %s308
        $region40: #{tpu_custom_call.1} parent=27 // pred_fallthru
          _
      $region28: #{tpu_custom_call.1} parent=5 // pred_fallthru
        _
      %p327 = scmp.le.s32.totalorder 2, %s17
      // Predicated region
      $region41: #{tpu_custom_call.1} parent=5 // pred_check
        %p328 = pneg %p327
      $region42: #{tpu_custom_call.1} parent=5 // pred_check_branch
        %330 = sbr.rel (%p328) target = $region44
      $region43: #{tpu_custom_call.1} parent=5 // pred_region
        %s331 = ssub.s32 %s17, 2
        // Predicated region
        $region45: #{tpu_custom_call.1} parent=43 // pred_check
          %p332 = pneg %p125
        $region46: #{tpu_custom_call.1} parent=43 // pred_check_branch
          %334 = sbr.rel (%p332) target = $region48
        $region47: #{tpu_custom_call.1} parent=43 // pred_region
          %s335 = sand.u32 %s110, 1
          %s336 = scalar_lea.sflag [#allocation4], %s335
          %s337 = sand.u32 %s110, 1
          %s338 = smul.addr %s337, 8
          %s339 = scalar_lea.vmem [#allocation7], %s338
          %340 = dma.done %s336, 128
        $region48: #{tpu_custom_call.1} parent=43 // pred_fallthru
          _
      $region44: #{tpu_custom_call.1} parent=5 // pred_fallthru
        _
    $region6: #{tpu_custom_call.1} parent=1 // loop_footer
      %s21 = sadd.s32 1, %s17
    $region7: #{tpu_custom_call.1} parent=1 // loop_footer_branch
      %16 = sbr.rel target = $region3
    $region8: #{tpu_custom_call.1} parent=1 // loop_exit
      _
    %341 = vsyncpa [#allocation3], 1
    %s342 = scalar_lea.sflag [#allocation3], 1
    %343 = vsyncpa %s342, 1
    %344 = vsyncpa [#allocation6], 1
    %s345 = scalar_lea.sflag [#allocation6], 1
    %346 = vsyncpa %s345, 1
    %347 = vsyncpa [#allocation4], 1
    %s348 = scalar_lea.sflag [#allocation4], 1
    %349 = vsyncpa %s348, 1

</llo_original>
